<compile_context>
chip_gen: v7x
topology: tpu7x:2x2x1
jax: 0.10.0
libtpu: 0.0.40
codegen_flags: <defaults>
</compile_context>

<pallas_src>
import functools

import jax
import jax.numpy as jnp
from jax.experimental import pallas as pl
from jax.experimental.pallas import tpu as pltpu


def _round_up(x, m):
    return (x + m - 1) // m * m


def _cdiv(a, b):
    return (a + b - 1) // b


def godin_head_kernel(feat_ref, gate_ref, w_ref, out_ref):
    """Fused UpperNet head for one batch tile.

    feat_ref : VMEM [TB, Fp]   features (compute dtype, zero-padded columns)
    gate_ref : VMEM [TB, 1]    f32, precomputed 1/sigmoid(BN(g(feat))) per row
    w_ref    : VMEM [Fp, Cpad] norm(w_dist).T zero-padded (resident, 1 copy)
    out_ref  : VMEM [TB, Cpad] cols 0..C-1 hold the logits
    """
    feat = feat_ref[...]                        # keep stored dtype for the MXU

    # Single lane-dense MXU matmul (cosine numerator), f32 accumulation.
    m = jnp.dot(feat, w_ref[...], preferred_element_type=jnp.float32)  # [TB,Cpad]

    # Row-wise 1 / (||feat||_2 + 1e-4)  (the norm() from the PyTorch spec);
    # it commutes with the matmul so it is applied afterwards.  Upcast to f32
    # only for the sum of squares.
    f32 = feat.astype(jnp.float32)
    approx = bool(feat.dtype != jnp.float32)    # EUP approx is fine for the bf16 path
    inv_norm = pl.reciprocal(
        jnp.sqrt(jnp.sum(f32 * f32, axis=1, keepdims=True)) + 1e-4, approx=approx)

    out_ref[...] = (m * (inv_norm * gate_ref[...])).astype(out_ref.dtype)


def godin_head(feat, g_lin, w_dist, bn_gamma, bn_beta, *,
               compute_dtype=jnp.bfloat16):
    """UpperNet head: logits = Cosine(feat) / sigmoid(BatchNorm1d(g_lin)).

    feat  : [B, F] features from the base model.
    g_lin : [B, 1] = feat @ w_g.T + b_g, computed where feat was produced so
            the head never re-reads feat from HBM for the BN statistics.
    """
    B, F = feat.shape
    C = w_dist.shape[0]
    in_bytes = jnp.dtype(compute_dtype).itemsize

    # ---- parameter prep (outside the kernel hot path) ----
    w_dist = w_dist.astype(jnp.float32)
    w_n = w_dist / (jnp.linalg.norm(w_dist, axis=1, keepdims=True) + 1e-4)
    Fp = _round_up(F, 128)                   # lane-dense feat / full MXU K strip
    Cpad = _round_up(C, 128)                 # lane-dense (unmasked) output stores
    w_pad = jnp.zeros((Fp, Cpad), jnp.float32).at[:F, :C].set(w_n.T)
    w_pad = w_pad.astype(compute_dtype)      # bf16: 2-4x MXU throughput, f32 acc

    # ---- BatchNorm1d(1) training-mode batch statistics (unpadded batch),
    #      folded with the sigmoid into a per-row gate:
    #      1/sigmoid(z) == 1 + exp(-z)  ->  no divide over [TB, Cpad]. ----
    g_lin = g_lin.astype(jnp.float32).reshape(B, 1)
    mean = jnp.mean(g_lin)
    var = jnp.mean((g_lin - mean) ** 2)                 # biased var (PyTorch BN fwd)
    z = bn_gamma[0] * (g_lin - mean) * jax.lax.rsqrt(var + 1e-5) + bn_beta[0]
    inv_g = 1.0 + jnp.exp(-z)                           # [B, 1] f32

    # ---- batch tile: target 512 rows, fit the VMEM budget, keep >= 2 grid
    #      steps when B > 16 (v7x has 2 TensorCores on the "parallel" axis). ----
    w_bytes = Fp * Cpad * in_bytes                      # resident, single copy
    per_row = 2 * (Fp * in_bytes + Cpad * 4 + 4)        # double-buffered tiles
    budget = 48 * 1024 * 1024                           # headroom under v7x 64 MiB
    tb_max = max(8, ((budget - w_bytes) // per_row) // 8 * 8)
    if B <= 16:
        TB = B                                          # full-dim block, no pad
    else:
        TB = max(8, min(512, tb_max, _round_up(_cdiv(B, 2), 8)))
    Bpad = _round_up(B, TB)

    # ---- operand prep: one fused pad + cast (only when actually needed) ----
    if (Fp != F) or (Bpad != B) or (feat.dtype != compute_dtype):
        feat_p = jnp.pad(feat, ((0, Bpad - B), (0, Fp - F))).astype(compute_dtype)
    else:
        feat_p = feat
    gate_p = jnp.pad(inv_g, ((0, Bpad - B), (0, 0))) if Bpad != B else inv_g

    footprint = w_bytes + 2 * TB * (Fp * in_bytes + Cpad * 4 + 4)
    vmem_limit = int(min(64 * 1024 * 1024, max(32 * 1024 * 1024, 2 * footprint)))

    out_padded = pl.pallas_call(
        godin_head_kernel,
        out_shape=jax.ShapeDtypeStruct((Bpad, Cpad), jnp.float32),
        grid_spec=pltpu.PrefetchScalarGridSpec(
            num_scalar_prefetch=0,
            grid=(Bpad // TB,),
            in_specs=[
                pl.BlockSpec((TB, Fp), lambda i: (i, 0)),   # streamed feat tile
                pl.BlockSpec((TB, 1), lambda i: (i, 0)),    # per-row gate
                # resident weight: untiled, single VMEM copy (no double buffer)
                pl.BlockSpec(memory_space=pltpu.MemorySpace.VMEM),
            ],
            out_specs=pl.BlockSpec((TB, Cpad), lambda i: (i, 0)),
        ),
        compiler_params=pltpu.CompilerParams(
            dimension_semantics=("parallel",),              # shards over v7x's 2 TCs
            vmem_limit_bytes=vmem_limit),
    )(feat_p, gate_p, w_pad)

    return out_padded[:B, :C]            # aligned truncation (drop padding only)


def base_model_stub(x, w_base, b_base):
    """Synthetic feature extractor (stands in for the injected base_model)."""
    B = x.shape[0]
    x_flat = x.reshape(B, -1)                           # NCHW -> [B, C*H*W]
    return jax.nn.relu(x_flat @ w_base.T + b_base)      # [B, F]


def upper_net_forward(x, params, *, compute_dtype=jnp.bfloat16):
    feat = base_model_stub(x, params["w_base"], params["b_base"])       # [B, F]
    # g-branch linear evaluated while feat is live (fused by XLA with the base
    # model epilogue) so the head kernel never re-reads feat for the BN stats.
    g_lin = feat @ params["w_g"].T + params["b_g"][0]                   # [B, 1]
    return godin_head(feat, g_lin, params["w_dist"],
                      params["bn_gamma"], params["bn_beta"],
                      compute_dtype=compute_dtype)


def reference_forward(x, params):
    """Pure-JAX reference mirroring the PyTorch forward (training-mode BN)."""
    hi = jax.lax.Precision.HIGHEST
    feat = base_model_stub(x, params["w_base"], params["b_base"])
    fn = feat / (jnp.linalg.norm(feat, axis=1, keepdims=True) + 1e-4)
    w = params["w_dist"]
    wn = w / (jnp.linalg.norm(w, axis=1, keepdims=True) + 1e-4)
    ret = jnp.matmul(fn, wn.T, precision=hi)
    g_lin = jnp.matmul(feat, params["w_g"].T, precision=hi) + params["b_g"][0]
    mean = jnp.mean(g_lin)
    var = jnp.mean((g_lin - mean) ** 2)
    g = jax.nn.sigmoid(params["bn_gamma"][0] * (g_lin - mean)
                       * jax.lax.rsqrt(var + 1e-5) + params["bn_beta"][0])
    return ret / g


if __name__ == "__main__":
    # Small shapes: x [2, 4, 16, 16], in_features=32, num_classes=8
    B, Cin, H, W = 2, 4, 16, 16
    IN_FEATURES, NUM_CLASSES = 32, 8

    key = jax.random.PRNGKey(0)
    k_x, k_wb, k_bb, k_wd, k_wg, k_bg = jax.random.split(key, 6)

    x = jax.random.normal(k_x, (B, Cin, H, W), dtype=jnp.float32)

    flat = Cin * H * W
    params = {
        # synthetic base model: Linear(flat -> IN_FEATURES) + ReLU
        "w_base": jax.random.normal(k_wb, (IN_FEATURES, flat), jnp.float32)
                  * (1.0 / jnp.sqrt(flat)),
        "b_base": jax.random.normal(k_bb, (IN_FEATURES,), jnp.float32) * 0.01,
        # Cosine.h: kaiming_normal_(nonlinearity='relu') -> std = sqrt(2 / fan_in)
        "w_dist": jax.random.normal(k_wd, (NUM_CLASSES, IN_FEATURES), jnp.float32)
                  * jnp.sqrt(2.0 / IN_FEATURES),
        # g[0]: Linear(IN_FEATURES -> 1)
        "w_g": jax.random.normal(k_wg, (1, IN_FEATURES), jnp.float32)
               * (1.0 / jnp.sqrt(IN_FEATURES)),
        "b_g": jax.random.normal(k_bg, (1,), jnp.float32) * 0.01,
        # g[1]: BatchNorm1d(1) affine params (fresh init)
        "bn_gamma": jnp.ones((1,), jnp.float32),
        "bn_beta": jnp.zeros((1,), jnp.float32),
    }

    ref = jax.block_until_ready(reference_forward(x, params))

    # Default (perf) path: bf16 operands, f32 accumulate.
    fwd_bf16 = jax.jit(functools.partial(upper_net_forward,
                                         compute_dtype=jnp.bfloat16))
    logits_bf16 = jax.block_until_ready(fwd_bf16(x, params))

    # Full-precision path.
    fwd_f32 = jax.jit(functools.partial(upper_net_forward,
                                        compute_dtype=jnp.float32))
    logits_f32 = jax.block_until_ready(fwd_f32(x, params))

    assert logits_bf16.shape == (B, NUM_CLASSES)
    assert logits_f32.shape == (B, NUM_CLASSES)
    # Tolerances account for TPU matmul default-precision differences between
    # the kernel path and the jnp reference (bf16 path is additionally looser).
    assert jnp.allclose(logits_f32, ref, atol=2e-2, rtol=2e-2), (logits_f32, ref)
    assert jnp.allclose(logits_bf16, ref, atol=6e-2, rtol=6e-2), (logits_bf16, ref)
    print("KERNEL_OK")
</pallas_src>

<mosaic_0001>
module attributes {stable_mosaic.version = 11 : i64} {
  func.func @godin_head_kernel(%arg0: i32, %arg1: memref<2x128xbf16, #tpu.memory_space<vmem>>, %arg2: memref<2x1xf32, #tpu.memory_space<vmem>>, %arg3: memref<128x128xbf16, #tpu.memory_space<vmem>>, %arg4: memref<2x128xf32, #tpu.memory_space<vmem>>) attributes {dimension_semantics = [#tpu.dimension_semantics<parallel>], iteration_bounds = array<i64: 1>, scalar_prefetch = 0 : i64, scratch_operands = 0 : i64, tpu.core_type = #tpu.core_type<tc>, window_params = [{transform_indices = @transform_0, window_bounds = array<i64: 2, 128>}, {transform_indices = @transform_1, window_bounds = array<i64: 2, 1>}, {pipeline_mode = #tpu.pipeline_mode<synchronous>, transform_indices = @transform_2, window_bounds = array<i64: 128, 128>}, {transform_indices = @transform_3, window_bounds = array<i64: 2, 128>}]} {
    %c0 = arith.constant 0 : index
    %c0_0 = arith.constant 0 : index
    %0 = vector.load %arg1[%c0, %c0_0] : memref<2x128xbf16, #tpu.memory_space<vmem>>, vector<2x128xbf16>
    %c0_1 = arith.constant 0 : index
    %c0_2 = arith.constant 0 : index
    %1 = vector.load %arg3[%c0_1, %c0_2] : memref<128x128xbf16, #tpu.memory_space<vmem>>, vector<128x128xbf16>
    %cst = arith.constant dense<0.000000e+00> : vector<2x128xf32>
    %2 = tpu.matmul %0, %1, %cst {dimension_numbers = #tpu.dot_dimension_numbers<[1], [0], [0], [1], [0, 0, 1, 1], [], []>} : vector<2x128xbf16>, vector<128x128xbf16>, vector<2x128xf32> -> vector<2x128xf32>
    %3 = arith.extf %0 : vector<2x128xbf16> to vector<2x128xf32>
    %4 = arith.mulf %3, %3 : vector<2x128xf32>
    %cst_3 = arith.constant dense<0.000000e+00> : vector<2xf32>
    %5 = vector.multi_reduction <add>, %4, %cst_3 [1] : vector<2x128xf32> to vector<2xf32>
    %6 = vector.shape_cast %5 : vector<2xf32> to vector<2x1xf32>
    %7 = math.sqrt %6 : vector<2x1xf32>
    %cst_4 = arith.constant 9.99999974E-5 : f32
    %8 = vector.broadcast %cst_4 : f32 to vector<2x1xf32>
    %9 = arith.addf %7, %8 : vector<2x1xf32>
    %10 = tpu.reciprocal %9 {approx = true} : vector<2x1xf32> -> vector<2x1xf32>
    %c0_5 = arith.constant 0 : index
    %c0_6 = arith.constant 0 : index
    %11 = vector.load %arg2[%c0_5, %c0_6] : memref<2x1xf32, #tpu.memory_space<vmem>>, vector<2x1xf32>
    %12 = arith.mulf %10, %11 : vector<2x1xf32>
    %13 = vector.broadcast %12 : vector<2x1xf32> to vector<2x128xf32>
    %14 = arith.mulf %2, %13 : vector<2x128xf32>
    %c0_7 = arith.constant 0 : index
    %c0_8 = arith.constant 0 : index
    %15 = vector.load %arg4[%c0_7, %c0_8] : memref<2x128xf32, #tpu.memory_space<vmem>>, vector<2x128xf32>
    tpu.vector_store %arg4[%c0_7, %c0_8], %14 {strides = array<i32>} : memref<2x128xf32, #tpu.memory_space<vmem>>, vector<2x128xf32>,
    return
  }
  func.func @transform_0(%arg0: i32) -> (i32, i32) {
    %c0_i32 = arith.constant 0 : i32
    %c0_i32_0 = arith.constant 0 : i32
    return %arg0, %c0_i32 : i32, i32
  }
  func.func @transform_1(%arg0: i32) -> (i32, i32) {
    %c0_i32 = arith.constant 0 : i32
    %c0_i32_0 = arith.constant 0 : i32
    return %arg0, %c0_i32 : i32, i32
  }
  func.func @transform_2(%arg0: i32) -> (i32, i32) {
    %c0_i32 = arith.constant 0 : i32
    %c0_i32_0 = arith.constant 0 : i32
    %c0_i32_1 = arith.constant 0 : i32
    return %c0_i32, %c0_i32_0 : i32, i32
  }
  func.func @transform_3(%arg0: i32) -> (i32, i32) {
    %c0_i32 = arith.constant 0 : i32
    %c0_i32_0 = arith.constant 0 : i32
    return %arg0, %c0_i32 : i32, i32
  }
}

</mosaic_0001>

<llo_original>
// kernel: upper_net_forward.1
$region0: #{upper_net_forward.1}
  #allocation0 [shape = 'u32[]', space=smem, size = 0x4, offset = 0x4, fixed_abs, tag = 'smem constant byte address 0x4 - core index']
  #allocation1 [shape = 'u32[144,128]{1,0:T(1,128)}', space=vmem, size = 0x12000, scoped, tag = 'internal scratch']
  %s0 = inlined_call_operand.vmem [shape: bf16[2,128], index: 0, kind: input, shape index: {}]
  %s1 = inlined_call_operand.vmem [shape: f32[2,1], index: 1, kind: input, shape index: {}]
  %s2 = inlined_call_operand.vmem [shape: bf16[128,128], index: 2, kind: input, shape index: {}]
  %s3 = inlined_call_operand.hbm [shape: f32[2,128], index: 3, kind: output, shape index: {}]
  %s4 = sld [smem:[#allocation0]]
  $region22: #{upper_net_forward.1} parent=0
    _
  %s6 = ssub.s32 1, %s4
  %s7 = scalar_select 0, %s6, %s4
  $region1: #{upper_net_forward.1} parent=0
    #allocation2 [shape = 'u8[1024]{0}', space=vmem, size = 0x400, scoped, tag = 'output window, operand 0, single buffered']
    #allocation3 [shape = 's32[1]{0}', space=sflag, size = 0x4, scoped, tag = 'scoped memory for upper_net_forward.1']
    %8 = vsyncpa [#allocation3], 0
    // Predicated region
    $region2: #{upper_net_forward.1} parent=1 // pred_check
      _
    $region3: #{upper_net_forward.1} parent=1 // pred_check_branch
      %10 = sbr.rel (0) target = $region5
    $region4: #{upper_net_forward.1} parent=1 // pred_region
      _
    $region5: #{upper_net_forward.1} parent=1 // pred_fallthru
      _
    // Predicated region
    $region6: #{upper_net_forward.1} parent=1 // pred_check
      _
    $region7: #{upper_net_forward.1} parent=1 // pred_check_branch
      %12 = sbr.rel (0) target = $region9
    $region8: #{upper_net_forward.1} parent=1 // pred_region
      _
    $region9: #{upper_net_forward.1} parent=1 // pred_fallthru
      _
    // Predicated region
    $region10: #{upper_net_forward.1} parent=1 // pred_check
      _
    $region11: #{upper_net_forward.1} parent=1 // pred_check_branch
      %14 = sbr.rel (0) target = $region13
    $region12: #{upper_net_forward.1} parent=1 // pred_region
      _
    $region13: #{upper_net_forward.1} parent=1 // pred_fallthru
      _
    %v16 = vld [vmem:[%s0] sm:$0x1]
    %v17 = vld [vmem:[%s2] sm:$0xf]
    %v18 = vld [vmem:[%s2 + $0x4] sm:$0xf]
    %v19 = vld [vmem:[%s2 + $0x8] sm:$0xf]
    %v20 = vld [vmem:[%s2 + $0xc] sm:$0xf]
    %v21 = vld [vmem:[%s2 + $0x10] sm:$0xf]
    %v22 = vld [vmem:[%s2 + $0x14] sm:$0xf]
    %v23 = vld [vmem:[%s2 + $0x18] sm:$0xf]
    %v24 = vld [vmem:[%s2 + $0x1c] sm:$0xf]
    %v25 = vld [vmem:[%s2 + $0x20] sm:$0xf]
    %v26 = vld [vmem:[%s2 + $0x24] sm:$0xf]
    %v27 = vld [vmem:[%s2 + $0x28] sm:$0xf]
    %v28 = vld [vmem:[%s2 + $0x2c] sm:$0xf]
    %v29 = vld [vmem:[%s2 + $0x30] sm:$0xf]
    %v30 = vld [vmem:[%s2 + $0x34] sm:$0xf]
    %v31 = vld [vmem:[%s2 + $0x38] sm:$0xf]
    %v32 = vld [vmem:[%s2 + $0x3c] sm:$0xf]
    %v49 = vunpack.c.l.b16 %v17
    %v50 = vunpack.c.l.b16 %v18
    %v51 = vunpack.c.l.b16 %v19
    %v52 = vunpack.c.l.b16 %v20
    %v53 = vunpack.c.l.b16 %v21
    %v54 = vunpack.c.l.b16 %v22
    %v55 = vunpack.c.l.b16 %v23
    %v56 = vunpack.c.l.b16 %v24
    %v57 = vunpack.c.l.b16 %v25
    %v58 = vunpack.c.l.b16 %v26
    %v59 = vunpack.c.l.b16 %v27
    %v60 = vunpack.c.l.b16 %v28
    %v61 = vunpack.c.l.b16 %v29
    %v62 = vunpack.c.l.b16 %v30
    %v63 = vunpack.c.l.b16 %v31
    %v64 = vunpack.c.l.b16 %v32
    %v65 = vpack.c.b16 %v50, %v49
    %v66 = vpack.c.b16 %v52, %v51
    %v67 = vpack.c.b16 %v54, %v53
    %v68 = vpack.c.b16 %v56, %v55
    %v69 = vpack.c.b16 %v58, %v57
    %v70 = vpack.c.b16 %v60, %v59
    %v71 = vpack.c.b16 %v62, %v61
    %v72 = vpack.c.b16 %v64, %v63
    %81 = vmatprep.subr.bf16.mxu0 0
    %82 = vmatpush1.bf16.msra.mxu0 %v65
    %83 = vmatprep.subr.bf16.mxu0 0
    %84 = vmatpush1.bf16.msra.mxu0 %v66
    %85 = vmatprep.subr.bf16.mxu0 0
    %86 = vmatpush1.bf16.msra.mxu0 %v67
    %87 = vmatprep.subr.bf16.mxu0 0
    %88 = vmatpush1.bf16.msra.mxu0 %v68
    %89 = vmatprep.subr.bf16.mxu0 0
    %90 = vmatpush1.bf16.msra.mxu0 %v69
    %91 = vmatprep.subr.bf16.mxu0 0
    %92 = vmatpush1.bf16.msra.mxu0 %v70
    %93 = vmatprep.subr.bf16.mxu0 0
    %94 = vmatpush1.bf16.msra.mxu0 %v71
    %95 = vmatprep.subr.bf16.mxu0 0
    %96 = vmatpush1.bf16.msra.mxu0 %v72
    %97 = vmatprep.subr.bf16.mxu0 0
    %98 = vmatpush1.bf16.msra.mxu0 0
    %99 = vmatprep.subr.bf16.mxu0 0
    %100 = vmatpush1.bf16.msra.mxu0 0
    %101 = vmatprep.subr.bf16.mxu0 0
    %102 = vmatpush1.bf16.msra.mxu0 0
    %103 = vmatprep.subr.bf16.mxu0 0
    %104 = vmatpush1.bf16.msra.mxu0 0
    %105 = vmatprep.subr.bf16.mxu0 0
    %106 = vmatpush1.bf16.msra.mxu0 0
    %107 = vmatprep.subr.bf16.mxu0 0
    %108 = vmatpush1.bf16.msra.mxu0 0
    %109 = vmatprep.subr.bf16.mxu0 0
    %110 = vmatpush1.bf16.msra.mxu0 0
    %111 = vmatprep.subr.bf16.mxu0 0
    %112 = vmatpush1.bf16.msra.mxu0 0
    %113 = vmatprep.mubr.bf16.mxu0 0
    %114 = vmatmul.mubr.bf16.gmra.mrb[0].mxu0 %v16
    %v115 = vpop.f32.mrb[0].mxu0
    %v116 = vadd.f32 0.0, %v115
    %v117 = vpop.f32.mrb[0].mxu0
    %v118 = vpop.f32.mrb[0].mxu0
    %v119 = vpop.f32.mrb[0].mxu0
    %120 = vdwg.mxu0
    %v121 = vunpack.c.l.bf16 %v16
    %v122 = vmul.f32 %v121, %v121
    %vm123 = vcmask 1041408
    %v124 = vsel %vm123, %v122, 0.0
    %125 = vadd.xlane.f32.xlu0 %v124
    %v126 = vpop.xlane.xlu0 %125
    %v127 = vrsqrt.pop %v126
    %v128 = vmul.f32 %v126, %v127
    %vm129 = vcmp.eq.f32.partialorder %v126, inf
    %v130 = vsel %vm129, %v126, %v128
    %vm131 = vcmp.eq.f32.partialorder %v126, 0.0
    %v132 = vand.u32 %v126, 2147483648
    %v133 = vsel %vm131, %v132, %v130
    %v134 = vadd.f32 %v133, 0.0001
    %v135 = vrcp.pop %v134
    %v136 = vld [vmem:[%s1] sm:$0x3]
    %v137 = vmul.f32 %v135, %v136
    %139 = vset.pattern.permute.xlu0 0
    %140 = vperm.xlu0 %139, %v137
    %v141 = vpop.permute.xlu0 %140
    %v143 = vmul.f32 %v116, %v141
    %144 = vst [vmem:[#allocation2] sm:$0x3] %v143
    // Predicated region
    $region14: #{upper_net_forward.1} parent=1 // pred_check
      _
    $region15: #{upper_net_forward.1} parent=1 // pred_check_branch
      %146 = sbr.rel (0) target = $region17
    $region16: #{upper_net_forward.1} parent=1 // pred_region
      %s148 = ssub.s32 32, 32
      %149 = vsyncadd [#allocation3], %s148
      %s151 = sshll.u32 [#allocation2], 4
      %s152 = int_to_ptr.vmem [resolvable:$true] %s151
      %154 = dma.vmem_to_hbm [thread:$0]  %s152, 32, %s3, [#allocation3]
    $region17: #{upper_net_forward.1} parent=1 // pred_fallthru
      _
    // Predicated region
    $region18: #{upper_net_forward.1} parent=1 // pred_check
      _
    $region19: #{upper_net_forward.1} parent=1 // pred_check_branch
      %156 = sbr.rel (0) target = $region21
    $region20: #{upper_net_forward.1} parent=1 // pred_region
      %157 = dma.done [#allocation3], 32
    $region21: #{upper_net_forward.1} parent=1 // pred_fallthru
      _
    %158 = vsyncpa [#allocation3], 1

</llo_original>
